<compile_context>
chip_gen: v6e
topology: v6e:2x2x1
jax: 0.10.0
libtpu: 0.0.40
codegen_flags: <defaults>
</compile_context>

<pallas_src>
import functools

import jax
import jax.numpy as jnp
import numpy as np
from jax.experimental import pallas as pl
from jax.experimental.pallas import tpu as pltpu


_MAX_BLOCK_ELEMS = 1024 * 1024          # ~4 MiB f32 per streaming block
_VMEM_LIMIT_BYTES = 48 * 1024 * 1024    # fits v7x's 64 MiB physical VMEM


def _round_up(v, m):
    return ((v + m - 1) // m) * m


def _pick_blocks(num_rows, num_cols):
    """Pick (row_block, lane_block) for a row-major (num_rows, num_cols) f32 array.

    Shallow rows / wide lanes: a (rb, tt) block is a strided DMA with tt*4-byte
    contiguous runs, so wide tt means fewer, longer descriptors.  rb is capped
    at 256 and, when num_rows >= 16, at ~half the rows so the row axis (the
    'parallel' grid axis) has at least 2 blocks for megacore sharding.
    """
    if num_rows <= 8:
        rb = num_rows                          # full extent (sublane rule OK)
    else:
        half = _round_up((num_rows + 1) // 2, 8)
        rb = min(256, half)
    max_tt = max(128, (_MAX_BLOCK_ELEMS // max(rb, 8)) // 128 * 128)
    if num_cols <= max_tt:
        tt = num_cols                          # full extent
    else:
        tt = max_tt
        # Prefer a lane-dense (multiple-of-128) divisor of T so the last t-tile
        # is not ragged; don't shrink below half the byte budget.
        for cand in range(max_tt, max(max_tt // 2, 128) - 1, -128):
            if num_cols % cand == 0:
                tt = cand
                break
    return rb, tt


def _stats_kernel(x_ref, shift_ref, sum_ref, sq_ref, *, n_rows, n_cols):
    """Streamed per-row sum and sum-of-squares of (x - shift).

    x_ref: (rb, tt) tile of the (R, T) view.  shift_ref: (rb, 1) per-row shift.
    sum_ref / sq_ref: (rb, 1) revisited-output accumulators (their block index
    is constant along the t axis, so they stay resident in VMEM -- no scratch).
    """
    ti = pl.program_id(1)

    @pl.when(ti == 0)
    def _():
        sum_ref[...] = jnp.zeros_like(sum_ref)
        sq_ref[...] = jnp.zeros_like(sq_ref)

    rb, tt = x_ref.shape
    row_ragged = (n_rows % rb) != 0
    col_ragged = (n_cols % tt) != 0

    def accumulate(d):
        sum_ref[...] += jnp.sum(d, axis=1, keepdims=True)
        sq_ref[...] += jnp.sum(d * d, axis=1, keepdims=True)

    if not (row_ragged or col_ragged):
        # All tiles exact: bare sub/mul/add path, pass stays at HBM roofline.
        accumulate(x_ref[...] - shift_ref[...])
    else:
        ri = pl.program_id(0)
        conds = []
        if row_ragged:
            conds.append(ri == pl.num_programs(0) - 1)
        if col_ragged:
            conds.append(ti == pl.num_programs(1) - 1)
        edge = functools.reduce(jnp.logical_or, conds)

        @pl.when(jnp.logical_not(edge))
        def _():
            accumulate(x_ref[...] - shift_ref[...])

        @pl.when(edge)
        def _():
            mask = None
            if row_ragged:
                rows = jax.lax.broadcasted_iota(jnp.int32, (rb, tt), 0) + ri * rb
                mask = rows < n_rows
            if col_ragged:
                cols = jax.lax.broadcasted_iota(jnp.int32, (rb, tt), 1) + ti * tt
                cmask = cols < n_cols
                mask = cmask if mask is None else (mask & cmask)
            # where() drops any NaN/Inf coming from unspecified VMEM padding.
            accumulate(jnp.where(mask, x_ref[...] - shift_ref[...], 0.0))


def _affine_kernel(x_ref, scale_ref, bias_ref, y_ref):
    """y = x * scale + bias, with bias = scale * loc precomputed per row.

    Ragged edge tiles compute on unspecified VMEM padding; the padded region is
    dropped when the output block is clipped on writeback, so no masking needed.
    """
    y_ref[...] = x_ref[...] * scale_ref[...] + bias_ref[...]


def _channel_moments(x2, shift_c, B, C, T):
    """Per-channel sum and sum-of-squares of (x - shift_c) over (B, T)."""
    R = B * C
    # If B*C would give < 2 row blocks, split T into `split` row chunks (a free
    # row-major reshape) so the 'parallel' row axis of the stats grid has >= 2
    # blocks (keeps both v7x TensorCores busy during the one-time init).
    split = 1
    while R * split < 16 and T % (split * 2) == 0 and (T // (split * 2)) >= 128:
        split *= 2
    Rv, Tv = R * split, T // split
    xv = x2.reshape(Rv, Tv)
    shift_rows = jnp.broadcast_to(
        shift_c.reshape(1, C, 1).astype(jnp.float32), (B, C, split)).reshape(Rv, 1)

    rb, tt = _pick_blocks(Rv, Tv)
    grid = (pl.cdiv(Rv, rb), pl.cdiv(Tv, tt))
    sums, sqs = pl.pallas_call(
        functools.partial(_stats_kernel, n_rows=Rv, n_cols=Tv),
        grid=grid,
        in_specs=[
            pl.BlockSpec((rb, tt), lambda r, t: (r, t)),
            pl.BlockSpec((rb, 1), lambda r, t: (r, 0)),
        ],
        out_specs=(
            pl.BlockSpec((rb, 1), lambda r, t: (r, 0)),
            pl.BlockSpec((rb, 1), lambda r, t: (r, 0)),
        ),
        out_shape=(
            jax.ShapeDtypeStruct((Rv, 1), jnp.float32),
            jax.ShapeDtypeStruct((Rv, 1), jnp.float32),
        ),
        compiler_params=pltpu.CompilerParams(
            dimension_semantics=("parallel", "arbitrary"),
            vmem_limit_bytes=_VMEM_LIMIT_BYTES),
    )(xv, shift_rows)
    sum_c = sums.reshape(B, C, split).sum(axis=(0, 2))
    sq_c = sqs.reshape(B, C, split).sum(axis=(0, 2))
    return sum_c, sq_c


def _init_loc_scale(x2, B, C, T):
    """Data-dependent init: two-pass (shifted) mean/std, robust in f32."""
    n = B * T
    zeros_c = jnp.zeros((C,), jnp.float32)
    sum_c, _ = _channel_moments(x2, zeros_c, B, C, T)          # pass 1: mean
    mean_c = sum_c / jnp.float32(n)
    rsum_c, ssd_c = _channel_moments(x2, mean_c, B, C, T)      # pass 2: centered
    ssd_c = ssd_c - rsum_c * rsum_c / jnp.float32(n)           # shift-error correction
    # torch.std is unbiased (ddof=1).  Guard n == 1 (torch would give NaN; here
    # std -> 0, scale -> 1e6): benign behavioral divergence, documented.
    denom = max(n - 1, 1)
    std_c = jnp.sqrt(jnp.maximum(ssd_c / jnp.float32(denom), 0.0))
    loc_c = -mean_c
    scale_c = 1.0 / (std_c + 1e-6)
    return loc_c, scale_c


def _affine(x2, scale_c, loc_c, B, C, T):
    """Tiled streaming affine on the (R, T) view: y = x*scale + (scale*loc)."""
    R = B * C
    scale_rows = jnp.broadcast_to(scale_c.reshape(1, C), (B, C)).reshape(R, 1)
    bias_rows = jnp.broadcast_to((scale_c * loc_c).reshape(1, C), (B, C)).reshape(R, 1)

    rb, tt = _pick_blocks(R, T)
    grid = (pl.cdiv(R, rb), pl.cdiv(T, tt))
    return pl.pallas_call(
        _affine_kernel,
        grid=grid,
        in_specs=[
            pl.BlockSpec((rb, tt), lambda r, t: (r, t)),
            pl.BlockSpec((rb, 1), lambda r, t: (r, 0)),
            pl.BlockSpec((rb, 1), lambda r, t: (r, 0)),
        ],
        out_specs=pl.BlockSpec((rb, tt), lambda r, t: (r, t)),
        out_shape=jax.ShapeDtypeStruct((R, T), jnp.float32),
        compiler_params=pltpu.CompilerParams(
            dimension_semantics=("parallel", "parallel"),
            vmem_limit_bytes=_VMEM_LIMIT_BYTES),
    )(x2, scale_rows, bias_rows)


def actnorm_forward(x, loc=None, scale=None, initialized=False):
    """ActNorm forward (logdet=True).  x: (B, C, T) f32.  Returns (y, logdet)."""
    B, C, T = x.shape
    x = x.astype(jnp.float32)
    x2 = x.reshape(B * C, T)   # free leading-dim collapse; T stays on lanes

    if not initialized:
        loc_c, scale_c = _init_loc_scale(x2, B, C, T)
    else:
        loc_c = loc.reshape(C).astype(jnp.float32)
        scale_c = scale.reshape(C).astype(jnp.float32)

    # logdet is a tiny C-length reduction: keep it out of the streaming kernels.
    logdet = jnp.sum(jnp.log(jnp.abs(scale_c))) * jnp.float32(B * T)

    y2 = _affine(x2, scale_c, loc_c, B, C, T)
    return y2.reshape(B, C, T), logdet


def _reference_actnorm(x):
    """Pure-numpy reference of the PyTorch forward (pretrained=False)."""
    x = np.asarray(x, dtype=np.float64)
    B, C, T = x.shape
    flat = np.transpose(x, (1, 0, 2)).reshape(C, -1)
    mean = flat.mean(axis=1)
    std = flat.std(axis=1, ddof=1)
    loc = (-mean)[None, :, None]
    scale = (1.0 / (std + 1e-6))[None, :, None]
    y = scale * (x + loc)
    logdet = np.sum(np.log(np.abs(scale))) * B * T
    return y, logdet


if __name__ == "__main__":
    key = jax.random.PRNGKey(0)

    # Spec-sized demo shape: (B, C, T) = (2, 4, 16).
    B, C, T = 2, 4, 16
    x = jax.random.normal(key, (B, C, T), dtype=jnp.float32) * 2.0 + 0.5

    # Parameters as in nn.Parameter(zeros/ones); used only on the pretrained path.
    loc_param = jnp.zeros((1, C, 1), jnp.float32)
    scale_param = jnp.ones((1, C, 1), jnp.float32)

    # Default module behavior (pretrained=False): data-dependent init.
    y, logdet = actnorm_forward(x, initialized=False)
    y = jax.block_until_ready(y)
    logdet = jax.block_until_ready(logdet)

    y_ref, logdet_ref = _reference_actnorm(np.asarray(x))
    np.testing.assert_allclose(np.asarray(y), y_ref, rtol=1e-4, atol=1e-4)
    np.testing.assert_allclose(float(logdet), logdet_ref, rtol=1e-4, atol=1e-4)

    # Pretrained / already-initialized path (identity with default params).
    y2, logdet2 = actnorm_forward(x, loc=loc_param, scale=scale_param,
                                  initialized=True)
    jax.block_until_ready(y2)
    np.testing.assert_allclose(np.asarray(y2), np.asarray(x), rtol=1e-5, atol=1e-5)
    np.testing.assert_allclose(float(logdet2), 0.0, atol=1e-5)

    # Ragged multi-row-block shape: exercises the conditional edge masking and
    # the >=2-row-block (megacore) path.
    B2, C2, T2 = 5, 4, 333
    x_big = (jax.random.normal(jax.random.PRNGKey(1), (B2, C2, T2), jnp.float32)
             * 3.0 - 1.0)
    yb, ldb = actnorm_forward(x_big, initialized=False)
    jax.block_until_ready(yb)
    yb_ref, ldb_ref = _reference_actnorm(np.asarray(x_big))
    np.testing.assert_allclose(np.asarray(yb), yb_ref, rtol=1e-4, atol=1e-4)
    np.testing.assert_allclose(float(ldb), ldb_ref, rtol=1e-4, atol=1e-4)

    print("KERNEL_OK")
</pallas_src>

<mosaic_0001>
module attributes {stable_mosaic.version = 11 : i64} {
  func.func @_stats_kernel(%arg0: i32, %arg1: i32, %arg2: memref<8x16xf32, #tpu.memory_space<vmem>>, %arg3: memref<8x1xf32, #tpu.memory_space<vmem>>, %arg4: memref<8x1xf32, #tpu.memory_space<vmem>>, %arg5: memref<8x1xf32, #tpu.memory_space<vmem>>) attributes {dimension_semantics = [#tpu.dimension_semantics<parallel>, #tpu.dimension_semantics<arbitrary>], iteration_bounds = array<i64: 1, 1>, scalar_prefetch = 0 : i64, scratch_operands = 0 : i64, tpu.core_type = #tpu.core_type<tc>, window_params = [{transform_indices = @transform_0, window_bounds = array<i64: 8, 16>}, {transform_indices = @transform_1, window_bounds = array<i64: 8, 1>}, {transform_indices = @transform_2, window_bounds = array<i64: 8, 1>}, {transform_indices = @transform_3, window_bounds = array<i64: 8, 1>}]} {
    %c0_i32 = arith.constant 0 : i32
    %0 = arith.cmpi eq, %arg1, %c0_i32 : i32
    %1 = arith.extui %0 : i1 to i32
    %c0_i32_0 = arith.constant 0 : i32
    %2 = arith.cmpi ne, %1, %c0_i32_0 : i32
    scf.if %2 {
      %cst_13 = arith.constant 0.000000e+00 : f32
      %18 = vector.broadcast %cst_13 : f32 to vector<8x1xf32>
      %c0_14 = arith.constant 0 : index
      %c0_15 = arith.constant 0 : index
      %19 = vector.load %arg4[%c0_14, %c0_15] : memref<8x1xf32, #tpu.memory_space<vmem>>, vector<8x1xf32>
      tpu.vector_store %arg4[%c0_14, %c0_15], %18 {strides = array<i32>} : memref<8x1xf32, #tpu.memory_space<vmem>>, vector<8x1xf32>,
      %cst_16 = arith.constant 0.000000e+00 : f32
      %20 = vector.broadcast %cst_16 : f32 to vector<8x1xf32>
      %c0_17 = arith.constant 0 : index
      %c0_18 = arith.constant 0 : index
      %21 = vector.load %arg5[%c0_17, %c0_18] : memref<8x1xf32, #tpu.memory_space<vmem>>, vector<8x1xf32>
      tpu.vector_store %arg5[%c0_17, %c0_18], %20 {strides = array<i32>} : memref<8x1xf32, #tpu.memory_space<vmem>>, vector<8x1xf32>,
    } else {
    }
    %c0 = arith.constant 0 : index
    %c0_1 = arith.constant 0 : index
    %3 = vector.load %arg2[%c0, %c0_1] : memref<8x16xf32, #tpu.memory_space<vmem>>, vector<8x16xf32>
    %c0_2 = arith.constant 0 : index
    %c0_3 = arith.constant 0 : index
    %4 = vector.load %arg3[%c0_2, %c0_3] : memref<8x1xf32, #tpu.memory_space<vmem>>, vector<8x1xf32>
    %5 = vector.broadcast %4 : vector<8x1xf32> to vector<8x16xf32>
    %6 = arith.subf %3, %5 : vector<8x16xf32>
    %c0_4 = arith.constant 0 : index
    %c0_5 = arith.constant 0 : index
    %7 = vector.load %arg4[%c0_4, %c0_5] : memref<8x1xf32, #tpu.memory_space<vmem>>, vector<8x1xf32>
    %cst = arith.constant dense<0.000000e+00> : vector<8xf32>
    %8 = vector.multi_reduction <add>, %6, %cst [1] : vector<8x16xf32> to vector<8xf32>
    %9 = vector.shape_cast %8 : vector<8xf32> to vector<8x1xf32>
    %10 = arith.addf %7, %9 : vector<8x1xf32>
    %c0_6 = arith.constant 0 : index
    %c0_7 = arith.constant 0 : index
    %11 = vector.load %arg4[%c0_6, %c0_7] : memref<8x1xf32, #tpu.memory_space<vmem>>, vector<8x1xf32>
    tpu.vector_store %arg4[%c0_6, %c0_7], %10 {strides = array<i32>} : memref<8x1xf32, #tpu.memory_space<vmem>>, vector<8x1xf32>,
    %c0_8 = arith.constant 0 : index
    %c0_9 = arith.constant 0 : index
    %12 = vector.load %arg5[%c0_8, %c0_9] : memref<8x1xf32, #tpu.memory_space<vmem>>, vector<8x1xf32>
    %13 = arith.mulf %6, %6 : vector<8x16xf32>
    %cst_10 = arith.constant dense<0.000000e+00> : vector<8xf32>
    %14 = vector.multi_reduction <add>, %13, %cst_10 [1] : vector<8x16xf32> to vector<8xf32>
    %15 = vector.shape_cast %14 : vector<8xf32> to vector<8x1xf32>
    %16 = arith.addf %12, %15 : vector<8x1xf32>
    %c0_11 = arith.constant 0 : index
    %c0_12 = arith.constant 0 : index
    %17 = vector.load %arg5[%c0_11, %c0_12] : memref<8x1xf32, #tpu.memory_space<vmem>>, vector<8x1xf32>
    tpu.vector_store %arg5[%c0_11, %c0_12], %16 {strides = array<i32>} : memref<8x1xf32, #tpu.memory_space<vmem>>, vector<8x1xf32>,
    return
  }
  func.func @transform_0(%arg0: i32, %arg1: i32) -> (i32, i32) {
    %c0_i32 = arith.constant 0 : i32
    return %arg0, %arg1 : i32, i32
  }
  func.func @transform_1(%arg0: i32, %arg1: i32) -> (i32, i32) {
    %c0_i32 = arith.constant 0 : i32
    %c0_i32_0 = arith.constant 0 : i32
    return %arg0, %c0_i32 : i32, i32
  }
  func.func @transform_2(%arg0: i32, %arg1: i32) -> (i32, i32) {
    %c0_i32 = arith.constant 0 : i32
    %c0_i32_0 = arith.constant 0 : i32
    return %arg0, %c0_i32 : i32, i32
  }
  func.func @transform_3(%arg0: i32, %arg1: i32) -> (i32, i32) {
    %c0_i32 = arith.constant 0 : i32
    %c0_i32_0 = arith.constant 0 : i32
    return %arg0, %c0_i32 : i32, i32
  }
}

</mosaic_0001>

<llo_original>
// kernel: tpu_custom_call.1
$region0: #{tpu_custom_call.1}
  #allocation0 [shape = 'u32[]', space=smem, size = 0x4, offset = 0x4, fixed_abs, tag = 'smem constant byte address 0x4 - core index']
  #allocation1 [shape = 'u32[144,128]{1,0:T(1,128)}', space=vmem, size = 0x12000, scoped, tag = 'internal scratch']
  %s0 = inlined_call_operand.vmem [shape: f32[8,16], index: 0, kind: input, shape index: {}]
  %s1 = inlined_call_operand.vmem [shape: f32[8,1], index: 1, kind: input, shape index: {}]
  %s2 = inlined_call_operand.vmem [shape: f32[8,1], index: 2, kind: output, shape index: {0}]
  %s3 = inlined_call_operand.vmem [shape: f32[8,1], index: 3, kind: output, shape index: {1}]
  %4 = xla_tuple %s2, %s3
  %s5 = sld [smem:[#allocation0]]
  $region30: #{tpu_custom_call.1} parent=0
    _
  %s7 = ssub.s32 1, %s5
  %s8 = scalar_select 0, %s7, %s5
  // Predicated region
  $region2: #{tpu_custom_call.1} parent=0 // pred_check
    _
  $region3: #{tpu_custom_call.1} parent=0 // pred_check_branch
    %10 = sbr.rel (0) target = $region5
  $region4: #{tpu_custom_call.1} parent=0 // pred_region
    _
  $region5: #{tpu_custom_call.1} parent=0 // pred_fallthru
    _
  // Predicated region
  $region6: #{tpu_custom_call.1} parent=0 // pred_check
    _
  $region7: #{tpu_custom_call.1} parent=0 // pred_check_branch
    %12 = sbr.rel (0) target = $region9
  $region8: #{tpu_custom_call.1} parent=0 // pred_region
    _
  $region9: #{tpu_custom_call.1} parent=0 // pred_fallthru
    _
  %p13 = scmp.eq.s32.totalorder 0, 0
  // Predicated region
  $region10: #{tpu_custom_call.1} parent=0 // pred_check
    %p14 = pneg %p13
  $region11: #{tpu_custom_call.1} parent=0 // pred_check_branch
    %16 = sbr.rel (%p14) target = $region13
  $region12: #{tpu_custom_call.1} parent=0 // pred_region
    %vm17 = vcmask 7168
    %18 = vst.msk [vmem:[%s2] sm:$0xff] %vm17, 0.0
    %19 = vst.msk [vmem:[%s3] sm:$0xff] %vm17, 0.0
  $region13: #{tpu_custom_call.1} parent=0 // pred_fallthru
    _
  %v20 = vld [vmem:[%s0] sm:$0xff]
  %v21 = vld [vmem:[%s1] sm:$0xff]
  %23 = vset.pattern.permute.xlu0 0
  %24 = vperm.xlu0 %23, %v21
  %v25 = vpop.permute.xlu0 %24
  %v27 = vsub.f32 %v20, %v25
  %v28 = vld [vmem:[%s2] sm:$0xff]
  %vm29 = vcmask 130048
  %v30 = vsel %vm29, %v27, 0.0
  %31 = vadd.xlane.f32.xlu0 %v30
  %v32 = vpop.xlane.xlu0 %31
  %v33 = vadd.f32 %v28, %v32
  %vm34 = vcmask 7168
  %35 = vst.msk [vmem:[%s2] sm:$0xff] %vm34, %v33
  %v36 = vld [vmem:[%s3] sm:$0xff]
  %v37 = vmul.f32 %v27, %v27
  %v38 = vsel %vm29, %v37, 0.0
  %39 = vadd.xlane.f32.xlu0 %v38
  %v40 = vpop.xlane.xlu0 %39
  %v41 = vadd.f32 %v36, %v40
  %42 = vst.msk [vmem:[%s3] sm:$0xff] %vm34, %v41
  // Predicated region
  $region14: #{tpu_custom_call.1} parent=0 // pred_check
    _
  $region15: #{tpu_custom_call.1} parent=0 // pred_check_branch
    %44 = sbr.rel (0) target = $region17
  $region16: #{tpu_custom_call.1} parent=0 // pred_region
    _
  $region17: #{tpu_custom_call.1} parent=0 // pred_fallthru
    _
  // Predicated region
  $region18: #{tpu_custom_call.1} parent=0 // pred_check
    _
  $region19: #{tpu_custom_call.1} parent=0 // pred_check_branch
    %46 = sbr.rel (0) target = $region21
  $region20: #{tpu_custom_call.1} parent=0 // pred_region
    _
  $region21: #{tpu_custom_call.1} parent=0 // pred_fallthru
    _
  // Predicated region
  $region22: #{tpu_custom_call.1} parent=0 // pred_check
    _
  $region23: #{tpu_custom_call.1} parent=0 // pred_check_branch
    %48 = sbr.rel (0) target = $region25
  $region24: #{tpu_custom_call.1} parent=0 // pred_region
    _
  $region25: #{tpu_custom_call.1} parent=0 // pred_fallthru
    _
  // Predicated region
  $region26: #{tpu_custom_call.1} parent=0 // pred_check
    _
  $region27: #{tpu_custom_call.1} parent=0 // pred_check_branch
    %50 = sbr.rel (0) target = $region29
  $region28: #{tpu_custom_call.1} parent=0 // pred_region
    _
  $region29: #{tpu_custom_call.1} parent=0 // pred_fallthru
    _

</llo_original>
